<compile_context>
chip_gen: v5e
topology: v5e:2x2
jax: 0.10.0
libtpu: 0.0.40
codegen_flags: <defaults>
</compile_context>

<pallas_src>
import functools

import jax
import jax.numpy as jnp
from jax.experimental import pallas as pl
from jax.experimental.pallas import tpu as pltpu

INPUT_DIM = 42
NUM_CLASSES = 28
HIDDEN = (128, 64, 32)
_LANE = 128


def _mlp_kernel(x_ref,
                w1_ref, b1_ref,
                w2_ref, b2_ref,
                w3_ref, b3_ref,
                w4_ref, b4_ref,
                o_ref):
    """Fused 4-layer MLP on one feature-major batch tile.

    x_ref : (42, TB) bf16
    w_i   : (out_i, in_i) bf16 (PyTorch layout), b_i : (out_i, 1) f32
    o_ref : (28, TB) f32 logits
    """
    h = x_ref[...]                                                   # bf16 (42, TB)

    # Layer 1: 42 -> 128, ReLU   (Dropout(0.3) identity at inference)
    h = jnp.dot(w1_ref[...], h, preferred_element_type=jnp.float32) + b1_ref[...]
    h = jnp.maximum(h, 0.0).astype(jnp.bfloat16)

    # Layer 2: 128 -> 64, ReLU   (Dropout(0.2) identity at inference)
    h = jnp.dot(w2_ref[...], h, preferred_element_type=jnp.float32) + b2_ref[...]
    h = jnp.maximum(h, 0.0).astype(jnp.bfloat16)

    # Layer 3: 64 -> 32, ReLU
    h = jnp.dot(w3_ref[...], h, preferred_element_type=jnp.float32) + b3_ref[...]
    h = jnp.maximum(h, 0.0).astype(jnp.bfloat16)

    # Layer 4: 32 -> 28 logits (no activation)
    out = jnp.dot(w4_ref[...], h, preferred_element_type=jnp.float32) + b4_ref[...]
    o_ref[...] = out.astype(o_ref.dtype)


def _round_up(x, m):
    return ((x + m - 1) // m) * m


def _choose_tiling(batch, max_batch_tile):
    """Adaptive batch tile: TB multiple of 128, B_pad barely exceeds B, and
    >=2 grid steps once the batch is big enough (keeps both v7x cores busy)."""
    n_tiles = max(1, -(-batch // max_batch_tile))
    if n_tiles == 1 and batch >= 2048:
        n_tiles = 2
    tb = _round_up(-(-batch // n_tiles), _LANE)
    return tb, n_tiles * tb


@functools.partial(jax.jit, static_argnames=("max_batch_tile",))
def keypoint_mlp_forward(x, params, *, max_batch_tile=8192):
    """Fused MLP forward.

    x: (B, 42) float32.  params: list of (W (out,in) f32, b (out,) f32), PyTorch layout.
    Returns (B, NUM_CLASSES) float32 logits.
    """
    B = x.shape[0]
    TB, B_pad = _choose_tiling(B, max_batch_tile)

    # Single fused layout pass: feature-major transpose + bf16 cast for the MXU
    # + minimal batch pad.  (A producer emitting (42, B) bf16 can skip this.)
    x_t = x.T.astype(jnp.bfloat16)                                   # (42, B)
    if B_pad != B:
        x_t = jnp.pad(x_t, ((0, 0), (0, B_pad - B)))

    flat = []
    for (w, b) in params:
        flat.append(w.astype(jnp.bfloat16))                          # (out, in)
        flat.append(b.reshape(-1, 1).astype(jnp.float32))            # (out, 1)

    # Weights/biases: full-array blocks, constant index_map -> fetched from HBM
    # once and VMEM-resident across all grid steps.
    weight_specs = [pl.BlockSpec(p.shape, lambda i: (0, 0)) for p in flat]

    grid = (B_pad // TB,)

    dims = (INPUT_DIM,) + HIDDEN + (NUM_CLASSES,)
    flops = 2 * B_pad * sum(di * do for di, do in zip(dims[:-1], dims[1:]))
    bytes_accessed = (B_pad * INPUT_DIM * 2                          # bf16 x read
                      + B_pad * NUM_CLASSES * 4                      # f32 logits write
                      + sum(int(p.size) * p.dtype.itemsize for p in flat))

    out_t = pl.pallas_call(
        _mlp_kernel,
        out_shape=jax.ShapeDtypeStruct((NUM_CLASSES, B_pad), jnp.float32),
        grid_spec=pltpu.PrefetchScalarGridSpec(
            num_scalar_prefetch=0,
            grid=grid,
            in_specs=[pl.BlockSpec((INPUT_DIM, TB), lambda i: (0, i))] + weight_specs,
            out_specs=pl.BlockSpec((NUM_CLASSES, TB), lambda i: (0, i)),
        ),
        compiler_params=pltpu.CompilerParams(
            dimension_semantics=("parallel",),
            vmem_limit_bytes=48 * 1024 * 1024),
        cost_estimate=pl.CostEstimate(
            flops=flops, transcendentals=0, bytes_accessed=bytes_accessed),
    )(x_t, *flat)

    # (28, B_pad) -> (B, 28); back-transpose is tiny (28 rows).
    return out_t[:, :B].T


def init_params(key):
    """Deterministic init in PyTorch nn.Linear layout: W (out, in), b (out,), f32."""
    dims = [INPUT_DIM, *HIDDEN, NUM_CLASSES]
    params = []
    for fan_in, fan_out in zip(dims[:-1], dims[1:]):
        kw, kb, key = jax.random.split(key, 3)
        bound = fan_in ** -0.5
        w = jax.random.uniform(kw, (fan_out, fan_in), jnp.float32, -bound, bound)
        b = jax.random.uniform(kb, (fan_out,), jnp.float32, -bound, bound)
        params.append((w, b))
    return params


def reference_forward(x, params):
    """Plain-JAX f32 reference (PyTorch module semantics, eval mode)."""
    h = x
    for i, (w, b) in enumerate(params):
        h = h @ w.T + b
        if i < len(params) - 1:
            h = jnp.maximum(h, 0.0)
    return h


def reference_forward_bf16(x, params):
    """Reference mirroring the kernel's bf16-operand / f32-accumulate math."""
    h = x.astype(jnp.bfloat16)
    for i, (w, b) in enumerate(params):
        h = jnp.dot(h, w.astype(jnp.bfloat16).T,
                    preferred_element_type=jnp.float32) + b
        if i < len(params) - 1:
            h = jnp.maximum(h, 0.0).astype(jnp.bfloat16)
    return h


if __name__ == "__main__":
    key = jax.random.PRNGKey(0)
    kx, kp = jax.random.split(key)

    B = 8  # small demo batch
    x = jax.random.normal(kx, (B, INPUT_DIM), jnp.float32)
    params = init_params(kp)

    out = keypoint_mlp_forward(x, params)
    out = jax.block_until_ready(out)
    assert out.shape == (B, NUM_CLASSES)

    # Tight check vs a reference using the same bf16 quantization as the kernel.
    ref_q = reference_forward_bf16(x, params)
    assert jnp.allclose(out, ref_q, atol=2e-3, rtol=2e-3), \
        "mismatch vs bf16-matched reference"

    # Looser semantic check vs the pure-f32 PyTorch-equivalent reference
    # (difference is only bf16 quantization of inputs/weights/activations).
    ref = reference_forward(x, params)
    assert jnp.allclose(out, ref, atol=5e-2, rtol=5e-2), \
        "mismatch vs f32 reference"

    print("KERNEL_OK")
</pallas_src>

<mosaic_0001>
module attributes {stable_mosaic.version = 11 : i64} {
  func.func @_mlp_kernel(%arg0: i32, %arg1: memref<42x128xbf16, #tpu.memory_space<vmem>>, %arg2: memref<128x42xbf16, #tpu.memory_space<vmem>>, %arg3: memref<128x1xf32, #tpu.memory_space<vmem>>, %arg4: memref<64x128xbf16, #tpu.memory_space<vmem>>, %arg5: memref<64x1xf32, #tpu.memory_space<vmem>>, %arg6: memref<32x64xbf16, #tpu.memory_space<vmem>>, %arg7: memref<32x1xf32, #tpu.memory_space<vmem>>, %arg8: memref<28x32xbf16, #tpu.memory_space<vmem>>, %arg9: memref<28x1xf32, #tpu.memory_space<vmem>>, %arg10: memref<28x128xf32, #tpu.memory_space<vmem>>) attributes {dimension_semantics = [#tpu.dimension_semantics<parallel>], iteration_bounds = array<i64: 1>, scalar_prefetch = 0 : i64, scratch_operands = 0 : i64, tpu.core_type = #tpu.core_type<tc>, window_params = [{transform_indices = @transform_0, window_bounds = array<i64: 42, 128>}, {pipeline_mode = #tpu.pipeline_mode<synchronous>, transform_indices = @transform_1, window_bounds = array<i64: 128, 42>}, {pipeline_mode = #tpu.pipeline_mode<synchronous>, transform_indices = @transform_2, window_bounds = array<i64: 128, 1>}, {pipeline_mode = #tpu.pipeline_mode<synchronous>, transform_indices = @transform_3, window_bounds = array<i64: 64, 128>}, {pipeline_mode = #tpu.pipeline_mode<synchronous>, transform_indices = @transform_4, window_bounds = array<i64: 64, 1>}, {pipeline_mode = #tpu.pipeline_mode<synchronous>, transform_indices = @transform_5, window_bounds = array<i64: 32, 64>}, {pipeline_mode = #tpu.pipeline_mode<synchronous>, transform_indices = @transform_6, window_bounds = array<i64: 32, 1>}, {pipeline_mode = #tpu.pipeline_mode<synchronous>, transform_indices = @transform_7, window_bounds = array<i64: 28, 32>}, {pipeline_mode = #tpu.pipeline_mode<synchronous>, transform_indices = @transform_8, window_bounds = array<i64: 28, 1>}, {transform_indices = @transform_9, window_bounds = array<i64: 28, 128>}]} {
    %c0 = arith.constant 0 : index
    %c0_0 = arith.constant 0 : index
    %0 = vector.load %arg1[%c0, %c0_0] : memref<42x128xbf16, #tpu.memory_space<vmem>>, vector<42x128xbf16>
    %c0_1 = arith.constant 0 : index
    %c0_2 = arith.constant 0 : index
    %1 = vector.load %arg2[%c0_1, %c0_2] : memref<128x42xbf16, #tpu.memory_space<vmem>>, vector<128x42xbf16>
    %cst = arith.constant dense<0.000000e+00> : vector<128x128xf32>
    %2 = tpu.matmul %1, %0, %cst {dimension_numbers = #tpu.dot_dimension_numbers<[1], [0], [0], [1], [0, 0, 1, 1], [], []>} : vector<128x42xbf16>, vector<42x128xbf16>, vector<128x128xf32> -> vector<128x128xf32>
    %c0_3 = arith.constant 0 : index
    %c0_4 = arith.constant 0 : index
    %3 = vector.load %arg3[%c0_3, %c0_4] : memref<128x1xf32, #tpu.memory_space<vmem>>, vector<128x1xf32>
    %4 = vector.broadcast %3 : vector<128x1xf32> to vector<128x128xf32>
    %5 = arith.addf %2, %4 : vector<128x128xf32>
    %cst_5 = arith.constant 0.000000e+00 : f32
    %6 = vector.broadcast %cst_5 : f32 to vector<128x128xf32>
    %7 = arith.maximumf %5, %6 : vector<128x128xf32>
    %8 = arith.truncf %7 : vector<128x128xf32> to vector<128x128xbf16>
    %c0_6 = arith.constant 0 : index
    %c0_7 = arith.constant 0 : index
    %9 = vector.load %arg4[%c0_6, %c0_7] : memref<64x128xbf16, #tpu.memory_space<vmem>>, vector<64x128xbf16>
    %cst_8 = arith.constant dense<0.000000e+00> : vector<64x128xf32>
    %10 = tpu.matmul %9, %8, %cst_8 {dimension_numbers = #tpu.dot_dimension_numbers<[1], [0], [0], [1], [0, 0, 1, 1], [], []>} : vector<64x128xbf16>, vector<128x128xbf16>, vector<64x128xf32> -> vector<64x128xf32>
    %c0_9 = arith.constant 0 : index
    %c0_10 = arith.constant 0 : index
    %11 = vector.load %arg5[%c0_9, %c0_10] : memref<64x1xf32, #tpu.memory_space<vmem>>, vector<64x1xf32>
    %12 = vector.broadcast %11 : vector<64x1xf32> to vector<64x128xf32>
    %13 = arith.addf %10, %12 : vector<64x128xf32>
    %cst_11 = arith.constant 0.000000e+00 : f32
    %14 = vector.broadcast %cst_11 : f32 to vector<64x128xf32>
    %15 = arith.maximumf %13, %14 : vector<64x128xf32>
    %16 = arith.truncf %15 : vector<64x128xf32> to vector<64x128xbf16>
    %c0_12 = arith.constant 0 : index
    %c0_13 = arith.constant 0 : index
    %17 = vector.load %arg6[%c0_12, %c0_13] : memref<32x64xbf16, #tpu.memory_space<vmem>>, vector<32x64xbf16>
    %cst_14 = arith.constant dense<0.000000e+00> : vector<32x128xf32>
    %18 = tpu.matmul %17, %16, %cst_14 {dimension_numbers = #tpu.dot_dimension_numbers<[1], [0], [0], [1], [0, 0, 1, 1], [], []>} : vector<32x64xbf16>, vector<64x128xbf16>, vector<32x128xf32> -> vector<32x128xf32>
    %c0_15 = arith.constant 0 : index
    %c0_16 = arith.constant 0 : index
    %19 = vector.load %arg7[%c0_15, %c0_16] : memref<32x1xf32, #tpu.memory_space<vmem>>, vector<32x1xf32>
    %20 = vector.broadcast %19 : vector<32x1xf32> to vector<32x128xf32>
    %21 = arith.addf %18, %20 : vector<32x128xf32>
    %cst_17 = arith.constant 0.000000e+00 : f32
    %22 = vector.broadcast %cst_17 : f32 to vector<32x128xf32>
    %23 = arith.maximumf %21, %22 : vector<32x128xf32>
    %24 = arith.truncf %23 : vector<32x128xf32> to vector<32x128xbf16>
    %c0_18 = arith.constant 0 : index
    %c0_19 = arith.constant 0 : index
    %25 = vector.load %arg8[%c0_18, %c0_19] : memref<28x32xbf16, #tpu.memory_space<vmem>>, vector<28x32xbf16>
    %cst_20 = arith.constant dense<0.000000e+00> : vector<28x128xf32>
    %26 = tpu.matmul %25, %24, %cst_20 {dimension_numbers = #tpu.dot_dimension_numbers<[1], [0], [0], [1], [0, 0, 1, 1], [], []>} : vector<28x32xbf16>, vector<32x128xbf16>, vector<28x128xf32> -> vector<28x128xf32>
    %c0_21 = arith.constant 0 : index
    %c0_22 = arith.constant 0 : index
    %27 = vector.load %arg9[%c0_21, %c0_22] : memref<28x1xf32, #tpu.memory_space<vmem>>, vector<28x1xf32>
    %28 = vector.broadcast %27 : vector<28x1xf32> to vector<28x128xf32>
    %29 = arith.addf %26, %28 : vector<28x128xf32>
    %c0_23 = arith.constant 0 : index
    %c0_24 = arith.constant 0 : index
    %30 = vector.load %arg10[%c0_23, %c0_24] : memref<28x128xf32, #tpu.memory_space<vmem>>, vector<28x128xf32>
    tpu.vector_store %arg10[%c0_23, %c0_24], %29 {strides = array<i32>} : memref<28x128xf32, #tpu.memory_space<vmem>>, vector<28x128xf32>,
    return
  }
  func.func @transform_0(%arg0: i32) -> (i32, i32) {
    %c0_i32 = arith.constant 0 : i32
    %c0_i32_0 = arith.constant 0 : i32
    return %c0_i32, %arg0 : i32, i32
  }
  func.func @transform_1(%arg0: i32) -> (i32, i32) {
    %c0_i32 = arith.constant 0 : i32
    %c0_i32_0 = arith.constant 0 : i32
    %c0_i32_1 = arith.constant 0 : i32
    return %c0_i32, %c0_i32_0 : i32, i32
  }
  func.func @transform_2(%arg0: i32) -> (i32, i32) {
    %c0_i32 = arith.constant 0 : i32
    %c0_i32_0 = arith.constant 0 : i32
    %c0_i32_1 = arith.constant 0 : i32
    return %c0_i32, %c0_i32_0 : i32, i32
  }
  func.func @transform_3(%arg0: i32) -> (i32, i32) {
    %c0_i32 = arith.constant 0 : i32
    %c0_i32_0 = arith.constant 0 : i32
    %c0_i32_1 = arith.constant 0 : i32
    return %c0_i32, %c0_i32_0 : i32, i32
  }
  func.func @transform_4(%arg0: i32) -> (i32, i32) {
    %c0_i32 = arith.constant 0 : i32
    %c0_i32_0 = arith.constant 0 : i32
    %c0_i32_1 = arith.constant 0 : i32
    return %c0_i32, %c0_i32_0 : i32, i32
  }
  func.func @transform_5(%arg0: i32) -> (i32, i32) {
    %c0_i32 = arith.constant 0 : i32
    %c0_i32_0 = arith.constant 0 : i32
    %c0_i32_1 = arith.constant 0 : i32
    return %c0_i32, %c0_i32_0 : i32, i32
  }
  func.func @transform_6(%arg0: i32) -> (i32, i32) {
    %c0_i32 = arith.constant 0 : i32
    %c0_i32_0 = arith.constant 0 : i32
    %c0_i32_1 = arith.constant 0 : i32
    return %c0_i32, %c0_i32_0 : i32, i32
  }
  func.func @transform_7(%arg0: i32) -> (i32, i32) {
    %c0_i32 = arith.constant 0 : i32
    %c0_i32_0 = arith.constant 0 : i32
    %c0_i32_1 = arith.constant 0 : i32
    return %c0_i32, %c0_i32_0 : i32, i32
  }
  func.func @transform_8(%arg0: i32) -> (i32, i32) {
    %c0_i32 = arith.constant 0 : i32
    %c0_i32_0 = arith.constant 0 : i32
    %c0_i32_1 = arith.constant 0 : i32
    return %c0_i32, %c0_i32_0 : i32, i32
  }
  func.func @transform_9(%arg0: i32) -> (i32, i32) {
    %c0_i32 = arith.constant 0 : i32
    %c0_i32_0 = arith.constant 0 : i32
    return %c0_i32, %arg0 : i32, i32
  }
}

</mosaic_0001>

<llo_original>
// kernel: keypoint_mlp_forward.1
$region0: #{keypoint_mlp_forward.1}
  #allocation0 [shape = 'u32[]', space=smem, size = 0x4, offset = 0x4, fixed_abs, tag = 'smem constant byte address 0x4 - core index']
  #allocation1 [shape = 'u32[72,128]{1,0:T(1,128)}', space=vmem, size = 0x9000, scoped, tag = 'internal scratch']
  %s0 = inlined_call_operand.vmem [shape: bf16[42,128], index: 0, kind: input, shape index: {}]
  %s1 = inlined_call_operand.vmem [shape: bf16[128,42], index: 1, kind: input, shape index: {}]
  %s2 = inlined_call_operand.vmem [shape: f32[128,1], index: 2, kind: input, shape index: {}]
  %s3 = inlined_call_operand.vmem [shape: bf16[64,128], index: 3, kind: input, shape index: {}]
  %s4 = inlined_call_operand.vmem [shape: f32[64,1], index: 4, kind: input, shape index: {}]
  %s5 = inlined_call_operand.vmem [shape: bf16[32,64], index: 5, kind: input, shape index: {}]
  %s6 = inlined_call_operand.vmem [shape: f32[32,1], index: 6, kind: input, shape index: {}]
  %s7 = inlined_call_operand.vmem [shape: bf16[28,32], index: 7, kind: input, shape index: {}]
  %s8 = inlined_call_operand.vmem [shape: f32[28,1], index: 8, kind: input, shape index: {}]
  %s9 = inlined_call_operand.vmem [shape: f32[28,128], index: 9, kind: output, shape index: {}]
  %s10 = sld [smem:[#allocation0]]
  $region46: #{keypoint_mlp_forward.1} parent=0
    _
  %s12 = ssub.s32 1, %s10
  %s13 = scalar_select 0, %s12, %s10
  // Predicated region
  $region2: #{keypoint_mlp_forward.1} parent=0 // pred_check
    _
  $region3: #{keypoint_mlp_forward.1} parent=0 // pred_check_branch
    %15 = sbr.rel (0) target = $region5
  $region4: #{keypoint_mlp_forward.1} parent=0 // pred_region
    _
  $region5: #{keypoint_mlp_forward.1} parent=0 // pred_fallthru
    _
  // Predicated region
  $region6: #{keypoint_mlp_forward.1} parent=0 // pred_check
    _
  $region7: #{keypoint_mlp_forward.1} parent=0 // pred_check_branch
    %17 = sbr.rel (0) target = $region9
  $region8: #{keypoint_mlp_forward.1} parent=0 // pred_region
    _
  $region9: #{keypoint_mlp_forward.1} parent=0 // pred_fallthru
    _
  // Predicated region
  $region10: #{keypoint_mlp_forward.1} parent=0 // pred_check
    _
  $region11: #{keypoint_mlp_forward.1} parent=0 // pred_check_branch
    %19 = sbr.rel (0) target = $region13
  $region12: #{keypoint_mlp_forward.1} parent=0 // pred_region
    _
  $region13: #{keypoint_mlp_forward.1} parent=0 // pred_fallthru
    _
  // Predicated region
  $region14: #{keypoint_mlp_forward.1} parent=0 // pred_check
    _
  $region15: #{keypoint_mlp_forward.1} parent=0 // pred_check_branch
    %21 = sbr.rel (0) target = $region17
  $region16: #{keypoint_mlp_forward.1} parent=0 // pred_region
    _
  $region17: #{keypoint_mlp_forward.1} parent=0 // pred_fallthru
    _
  // Predicated region
  $region18: #{keypoint_mlp_forward.1} parent=0 // pred_check
    _
  $region19: #{keypoint_mlp_forward.1} parent=0 // pred_check_branch
    %23 = sbr.rel (0) target = $region21
  $region20: #{keypoint_mlp_forward.1} parent=0 // pred_region
    _
  $region21: #{keypoint_mlp_forward.1} parent=0 // pred_fallthru
    _
  // Predicated region
  $region22: #{keypoint_mlp_forward.1} parent=0 // pred_check
    _
  $region23: #{keypoint_mlp_forward.1} parent=0 // pred_check_branch
    %25 = sbr.rel (0) target = $region25
  $region24: #{keypoint_mlp_forward.1} parent=0 // pred_region
    _
  $region25: #{keypoint_mlp_forward.1} parent=0 // pred_fallthru
    _
  // Predicated region
  $region26: #{keypoint_mlp_forward.1} parent=0 // pred_check
    _
  $region27: #{keypoint_mlp_forward.1} parent=0 // pred_check_branch
    %27 = sbr.rel (0) target = $region29
  $region28: #{keypoint_mlp_forward.1} parent=0 // pred_region
    _
  $region29: #{keypoint_mlp_forward.1} parent=0 // pred_fallthru
    _
  // Predicated region
  $region30: #{keypoint_mlp_forward.1} parent=0 // pred_check
    _
  $region31: #{keypoint_mlp_forward.1} parent=0 // pred_check_branch
    %29 = sbr.rel (0) target = $region33
  $region32: #{keypoint_mlp_forward.1} parent=0 // pred_region
    _
  $region33: #{keypoint_mlp_forward.1} parent=0 // pred_fallthru
    _
  // Predicated region
  $region34: #{keypoint_mlp_forward.1} parent=0 // pred_check
    _
  $region35: #{keypoint_mlp_forward.1} parent=0 // pred_check_branch
    %31 = sbr.rel (0) target = $region37
  $region36: #{keypoint_mlp_forward.1} parent=0 // pred_region
    _
  $region37: #{keypoint_mlp_forward.1} parent=0 // pred_fallthru
    _
  %v33 = vld [vmem:[%s0] sm:$0xf]
  %v34 = vld [vmem:[%s0 + $0x4] sm:$0xf]
  %v35 = vld [vmem:[%s0 + $0x8] sm:$0xf]
  %v36 = vld [vmem:[%s0 + $0xc] sm:$0xf]
  %v37 = vld [vmem:[%s0 + $0x10] sm:$0xf]
  %v38 = vld [vmem:[%s0 + $0x14] sm:$0x1]
  %v39 = vld [vmem:[%s1] sm:$0xf]
  %v40 = vld [vmem:[%s1 + $0x4] sm:$0xf]
  %v41 = vld [vmem:[%s1 + $0x8] sm:$0xf]
  %v42 = vld [vmem:[%s1 + $0xc] sm:$0xf]
  %v43 = vld [vmem:[%s1 + $0x10] sm:$0xf]
  %v44 = vld [vmem:[%s1 + $0x14] sm:$0xf]
  %v45 = vld [vmem:[%s1 + $0x18] sm:$0xf]
  %v46 = vld [vmem:[%s1 + $0x1c] sm:$0xf]
  %v47 = vld [vmem:[%s1 + $0x20] sm:$0xf]
  %v48 = vld [vmem:[%s1 + $0x24] sm:$0xf]
  %v49 = vld [vmem:[%s1 + $0x28] sm:$0xf]
  %v50 = vld [vmem:[%s1 + $0x2c] sm:$0xf]
  %v51 = vld [vmem:[%s1 + $0x30] sm:$0xf]
  %v52 = vld [vmem:[%s1 + $0x34] sm:$0xf]
  %v53 = vld [vmem:[%s1 + $0x38] sm:$0xf]
  %v54 = vld [vmem:[%s1 + $0x3c] sm:$0xf]
  %v55 = vld [vmem:[%s2] sm:$0xff]
  %v56 = vld [vmem:[%s2 + $0x8] sm:$0xff]
  %v57 = vld [vmem:[%s2 + $0x10] sm:$0xff]
  %v58 = vld [vmem:[%s2 + $0x18] sm:$0xff]
  %v59 = vld [vmem:[%s2 + $0x20] sm:$0xff]
  %v60 = vld [vmem:[%s2 + $0x28] sm:$0xff]
  %v61 = vld [vmem:[%s2 + $0x30] sm:$0xff]
  %v62 = vld [vmem:[%s2 + $0x38] sm:$0xff]
  %v63 = vld [vmem:[%s2 + $0x40] sm:$0xff]
  %v64 = vld [vmem:[%s2 + $0x48] sm:$0xff]
  %v65 = vld [vmem:[%s2 + $0x50] sm:$0xff]
  %v66 = vld [vmem:[%s2 + $0x58] sm:$0xff]
  %v67 = vld [vmem:[%s2 + $0x60] sm:$0xff]
  %v68 = vld [vmem:[%s2 + $0x68] sm:$0xff]
  %v69 = vld [vmem:[%s2 + $0x70] sm:$0xff]
  %v70 = vld [vmem:[%s2 + $0x78] sm:$0xff]
  %72 = vset.pattern.permute.xlu0 0
  %73 = vperm.xlu0 %72, %v55
  %v74 = vpop.permute.xlu0 %73
  %77 = vset.pattern.permute.xlu0 0
  %78 = vperm.xlu0 %77, %v56
  %v79 = vpop.permute.xlu0 %78
  %82 = vset.pattern.permute.xlu0 0
  %83 = vperm.xlu0 %82, %v57
  %v84 = vpop.permute.xlu0 %83
  %87 = vset.pattern.permute.xlu0 0
  %88 = vperm.xlu0 %87, %v58
  %v89 = vpop.permute.xlu0 %88
  %92 = vset.pattern.permute.xlu0 0
  %93 = vperm.xlu0 %92, %v59
  %v94 = vpop.permute.xlu0 %93
  %97 = vset.pattern.permute.xlu0 0
  %98 = vperm.xlu0 %97, %v60
  %v99 = vpop.permute.xlu0 %98
  %102 = vset.pattern.permute.xlu0 0
  %103 = vperm.xlu0 %102, %v61
  %v104 = vpop.permute.xlu0 %103
  %107 = vset.pattern.permute.xlu0 0
  %108 = vperm.xlu0 %107, %v62
  %v109 = vpop.permute.xlu0 %108
  %112 = vset.pattern.permute.xlu0 0
  %113 = vperm.xlu0 %112, %v63
  %v114 = vpop.permute.xlu0 %113
  %117 = vset.pattern.permute.xlu0 0
  %118 = vperm.xlu0 %117, %v64
  %v119 = vpop.permute.xlu0 %118
  %122 = vset.pattern.permute.xlu0 0
  %123 = vperm.xlu0 %122, %v65
  %v124 = vpop.permute.xlu0 %123
  %127 = vset.pattern.permute.xlu0 0
  %128 = vperm.xlu0 %127, %v66
  %v129 = vpop.permute.xlu0 %128
  %132 = vset.pattern.permute.xlu0 0
  %133 = vperm.xlu0 %132, %v67
  %v134 = vpop.permute.xlu0 %133
  %137 = vset.pattern.permute.xlu0 0
  %138 = vperm.xlu0 %137, %v68
  %v139 = vpop.permute.xlu0 %138
  %142 = vset.pattern.permute.xlu0 0
  %143 = vperm.xlu0 %142, %v69
  %v144 = vpop.permute.xlu0 %143
  %147 = vset.pattern.permute.xlu0 0
  %148 = vperm.xlu0 %147, %v70
  %v149 = vpop.permute.xlu0 %148
  %v167 = vunpack.c.l.b16 %v39
  %v168 = vunpack.c.l.b16 %v40
  %v169 = vunpack.c.l.b16 %v41
  %v170 = vunpack.c.l.b16 %v42
  %v171 = vunpack.c.l.b16 %v43
  %v172 = vunpack.c.l.b16 %v44
  %v173 = vunpack.c.l.b16 %v45
  %v174 = vunpack.c.l.b16 %v46
  %v175 = vunpack.c.l.b16 %v47
  %v176 = vunpack.c.l.b16 %v48
  %v177 = vunpack.c.l.b16 %v49
  %v178 = vunpack.c.l.b16 %v50
  %v179 = vunpack.c.l.b16 %v51
  %v180 = vunpack.c.l.b16 %v52
  %v181 = vunpack.c.l.b16 %v53
  %v182 = vunpack.c.l.b16 %v54
  %v183 = vpack.c.b16 %v168, %v167
  %v184 = vpack.c.b16 %v170, %v169
  %v185 = vpack.c.b16 %v172, %v171
  %v186 = vpack.c.b16 %v174, %v173
  %v187 = vpack.c.b16 %v176, %v175
  %v188 = vpack.c.b16 %v178, %v177
  %v189 = vpack.c.b16 %v180, %v179
  %v190 = vpack.c.b16 %v182, %v181
  %v197 = vunpack.c.l.b16 %v33
  %v198 = vunpack.c.l.b16 %v34
  %v199 = vunpack.c.l.b16 %v35
  %v200 = vunpack.c.l.b16 %v36
  %v201 = vunpack.c.l.b16 %v37
  %v202 = vunpack.c.l.b16 %v38
  %v203 = vpack.c.b16 %v198, %v197
  %v204 = vpack.c.b16 %v200, %v199
  %v205 = vpack.c.b16 %v202, %v201
  %vm208 = vcmask 343040
  %v210 = vsel %vm208, %v183, 0
  %v213 = vsel %vm208, %v184, 0
  %v216 = vsel %vm208, %v185, 0
  %v219 = vsel %vm208, %v186, 0
  %v222 = vsel %vm208, %v187, 0
  %v225 = vsel %vm208, %v188, 0
  %v228 = vsel %vm208, %v189, 0
  %v231 = vsel %vm208, %v190, 0
  %vm233 = vcmask 1044480
  %v235 = vsel %vm233, %v205, 0
  %237 = vmatpush.bf16.msra.mxu0 0
  %238 = vmatpush.bf16.msra.mxu0 0
  %239 = vmatpush.bf16.msra.mxu0 0
  %240 = vmatpush.bf16.msra.mxu0 0
  %241 = vmatpush.bf16.msra.mxu0 0
  %242 = vmatpush.bf16.msra.mxu0 %v235
  %243 = vmatpush.bf16.msra.mxu0 %v204
  %244 = vmatpush.bf16.msra.mxu0 %v203
  %245 = vmatmul.bf16.gmra.mxu0 %v210
  %v246 = vpop.f32.mrf.mxu0
  %v247 = vadd.f32 %v74, %v246
  %v248 = vpop.f32.mrf.mxu0
  %v249 = vadd.f32 %v79, %v248
  %250 = vmatmul.bf16.gmra.mxu0 %v213
  %v251 = vpop.f32.mrf.mxu0
  %v252 = vadd.f32 %v84, %v251
  %v253 = vpop.f32.mrf.mxu0
  %v254 = vadd.f32 %v89, %v253
  %255 = vmatmul.bf16.gmra.mxu0 %v216
  %v256 = vpop.f32.mrf.mxu0
  %v257 = vadd.f32 %v94, %v256
  %v258 = vpop.f32.mrf.mxu0
  %v259 = vadd.f32 %v99, %v258
  %260 = vmatmul.bf16.gmra.mxu0 %v219
  %v261 = vpop.f32.mrf.mxu0
  %v262 = vadd.f32 %v104, %v261
  %v263 = vpop.f32.mrf.mxu0
  %v264 = vadd.f32 %v109, %v263
  %265 = vmatmul.bf16.gmra.mxu0 %v222
  %v266 = vpop.f32.mrf.mxu0
  %v267 = vadd.f32 %v114, %v266
  %v268 = vpop.f32.mrf.mxu0
  %v269 = vadd.f32 %v119, %v268
  %270 = vmatmul.bf16.gmra.mxu0 %v225
  %v271 = vpop.f32.mrf.mxu0
  %v272 = vadd.f32 %v124, %v271
  %v273 = vpop.f32.mrf.mxu0
  %v274 = vadd.f32 %v129, %v273
  %275 = vmatmul.bf16.gmra.mxu0 %v228
  %v276 = vpop.f32.mrf.mxu0
  %v277 = vadd.f32 %v134, %v276
  %v278 = vpop.f32.mrf.mxu0
  %v279 = vadd.f32 %v139, %v278
  %280 = vmatmul.bf16.gmra.mxu0 %v231
  %v281 = vpop.f32.mrf.mxu0
  %v282 = vadd.f32 %v144, %v281
  %v283 = vpop.f32.mrf.mxu0
  %v284 = vadd.f32 %v149, %v283
  %285 = vdwg.mxu0
  %v286 = vmax.f32 %v247, 0.0
  %v287 = vmax.f32 %v249, 0.0
  %v288 = vmax.f32 %v252, 0.0
  %v289 = vmax.f32 %v254, 0.0
  %v290 = vmax.f32 %v257, 0.0
  %v291 = vmax.f32 %v259, 0.0
  %v292 = vmax.f32 %v262, 0.0
  %v293 = vmax.f32 %v264, 0.0
  %v294 = vmax.f32 %v267, 0.0
  %v295 = vmax.f32 %v269, 0.0
  %v296 = vmax.f32 %v272, 0.0
  %v297 = vmax.f32 %v274, 0.0
  %v298 = vmax.f32 %v277, 0.0
  %v299 = vmax.f32 %v279, 0.0
  %v300 = vmax.f32 %v282, 0.0
  %v301 = vmax.f32 %v284, 0.0
  %v302 = vpack.c.bf16 %v287, %v286
  %v303 = vpack.c.bf16 %v289, %v288
  %v304 = vpack.c.bf16 %v291, %v290
  %v305 = vpack.c.bf16 %v293, %v292
  %v306 = vpack.c.bf16 %v295, %v294
  %v307 = vpack.c.bf16 %v297, %v296
  %v308 = vpack.c.bf16 %v299, %v298
  %v309 = vpack.c.bf16 %v301, %v300
  %v310 = vld [vmem:[%s3] sm:$0xf]
  %v311 = vld [vmem:[%s3 + $0x4] sm:$0xf]
  %v312 = vld [vmem:[%s3 + $0x8] sm:$0xf]
  %v313 = vld [vmem:[%s3 + $0xc] sm:$0xf]
  %v314 = vld [vmem:[%s3 + $0x10] sm:$0xf]
  %v315 = vld [vmem:[%s3 + $0x14] sm:$0xf]
  %v316 = vld [vmem:[%s3 + $0x18] sm:$0xf]
  %v317 = vld [vmem:[%s3 + $0x1c] sm:$0xf]
  %v318 = vld [vmem:[%s4] sm:$0xff]
  %v319 = vld [vmem:[%s4 + $0x8] sm:$0xff]
  %v320 = vld [vmem:[%s4 + $0x10] sm:$0xff]
  %v321 = vld [vmem:[%s4 + $0x18] sm:$0xff]
  %v322 = vld [vmem:[%s4 + $0x20] sm:$0xff]
  %v323 = vld [vmem:[%s4 + $0x28] sm:$0xff]
  %v324 = vld [vmem:[%s4 + $0x30] sm:$0xff]
  %v325 = vld [vmem:[%s4 + $0x38] sm:$0xff]
  %327 = vset.pattern.permute.xlu0 0
  %328 = vperm.xlu0 %327, %v318
  %v329 = vpop.permute.xlu0 %328
  %332 = vset.pattern.permute.xlu0 0
  %333 = vperm.xlu0 %332, %v319
  %v334 = vpop.permute.xlu0 %333
  %337 = vset.pattern.permute.xlu0 0
  %338 = vperm.xlu0 %337, %v320
  %v339 = vpop.permute.xlu0 %338
  %342 = vset.pattern.permute.xlu0 0
  %343 = vperm.xlu0 %342, %v321
  %v344 = vpop.permute.xlu0 %343
  %347 = vset.pattern.permute.xlu0 0
  %348 = vperm.xlu0 %347, %v322
  %v349 = vpop.permute.xlu0 %348
  %352 = vset.pattern.permute.xlu0 0
  %353 = vperm.xlu0 %352, %v323
  %v354 = vpop.permute.xlu0 %353
  %357 = vset.pattern.permute.xlu0 0
  %358 = vperm.xlu0 %357, %v324
  %v359 = vpop.permute.xlu0 %358
  %362 = vset.pattern.permute.xlu0 0
  %363 = vperm.xlu0 %362, %v325
  %v364 = vpop.permute.xlu0 %363
  %v374 = vunpack.c.l.b16 %v310
  %v375 = vunpack.c.l.b16 %v311
  %v376 = vunpack.c.l.b16 %v312
  %v377 = vunpack.c.l.b16 %v313
  %v378 = vunpack.c.l.b16 %v314
  %v379 = vunpack.c.l.b16 %v315
  %v380 = vunpack.c.l.b16 %v316
  %v381 = vunpack.c.l.b16 %v317
  %v382 = vpack.c.b16 %v375, %v374
  %v383 = vpack.c.b16 %v377, %v376
  %v384 = vpack.c.b16 %v379, %v378
  %v385 = vpack.c.b16 %v381, %v380
  %390 = vmatpush.bf16.msra.mxu0 %v309
  %391 = vmatpush.bf16.msra.mxu0 %v308
  %392 = vmatpush.bf16.msra.mxu0 %v307
  %393 = vmatpush.bf16.msra.mxu0 %v306
  %394 = vmatpush.bf16.msra.mxu0 %v305
  %395 = vmatpush.bf16.msra.mxu0 %v304
  %396 = vmatpush.bf16.msra.mxu0 %v303
  %397 = vmatpush.bf16.msra.mxu0 %v302
  %398 = vmatmul.bf16.gmra.mxu0 %v382
  %v399 = vpop.f32.mrf.mxu0
  %v400 = vadd.f32 %v329, %v399
  %v401 = vpop.f32.mrf.mxu0
  %v402 = vadd.f32 %v334, %v401
  %403 = vmatmul.bf16.gmra.mxu0 %v383
  %v404 = vpop.f32.mrf.mxu0
  %v405 = vadd.f32 %v339, %v404
  %v406 = vpop.f32.mrf.mxu0
  %v407 = vadd.f32 %v344, %v406
  %408 = vmatmul.bf16.gmra.mxu0 %v384
  %v409 = vpop.f32.mrf.mxu0
  %v410 = vadd.f32 %v349, %v409
  %v411 = vpop.f32.mrf.mxu0
  %v412 = vadd.f32 %v354, %v411
  %413 = vmatmul.bf16.gmra.mxu0 %v385
  %v414 = vpop.f32.mrf.mxu0
  %v415 = vadd.f32 %v359, %v414
  %v416 = vpop.f32.mrf.mxu0
  %v417 = vadd.f32 %v364, %v416
  %418 = vdwg.mxu0
  %v419 = vmax.f32 %v400, 0.0
  %v420 = vmax.f32 %v402, 0.0
  %v421 = vmax.f32 %v405, 0.0
  %v422 = vmax.f32 %v407, 0.0
  %v423 = vmax.f32 %v410, 0.0
  %v424 = vmax.f32 %v412, 0.0
  %v425 = vmax.f32 %v415, 0.0
  %v426 = vmax.f32 %v417, 0.0
  %v427 = vpack.c.bf16 %v420, %v419
  %v428 = vpack.c.bf16 %v422, %v421
  %v429 = vpack.c.bf16 %v424, %v423
  %v430 = vpack.c.bf16 %v426, %v425
  %v431 = vld [vmem:[%s5] sm:$0xf]
  %v432 = vld [vmem:[%s5 + $0x4] sm:$0xf]
  %v433 = vld [vmem:[%s5 + $0x8] sm:$0xf]
  %v434 = vld [vmem:[%s5 + $0xc] sm:$0xf]
  %v435 = vld [vmem:[%s6] sm:$0xff]
  %v436 = vld [vmem:[%s6 + $0x8] sm:$0xff]
  %v437 = vld [vmem:[%s6 + $0x10] sm:$0xff]
  %v438 = vld [vmem:[%s6 + $0x18] sm:$0xff]
  %440 = vset.pattern.permute.xlu0 0
  %441 = vperm.xlu0 %440, %v435
  %v442 = vpop.permute.xlu0 %441
  %445 = vset.pattern.permute.xlu0 0
  %446 = vperm.xlu0 %445, %v436
  %v447 = vpop.permute.xlu0 %446
  %450 = vset.pattern.permute.xlu0 0
  %451 = vperm.xlu0 %450, %v437
  %v452 = vpop.permute.xlu0 %451
  %455 = vset.pattern.permute.xlu0 0
  %456 = vperm.xlu0 %455, %v438
  %v457 = vpop.permute.xlu0 %456
  %v463 = vunpack.c.l.b16 %v431
  %v464 = vunpack.c.l.b16 %v432
  %v465 = vunpack.c.l.b16 %v433
  %v466 = vunpack.c.l.b16 %v434
  %v467 = vpack.c.b16 %v464, %v463
  %v468 = vpack.c.b16 %v466, %v465
  %vm469 = vcmask 523264
  %v471 = vsel %vm469, %v467, 0
  %v474 = vsel %vm469, %v468, 0
  %476 = vmatpush.bf16.msra.mxu0 0
  %477 = vmatpush.bf16.msra.mxu0 0
  %478 = vmatpush.bf16.msra.mxu0 0
  %479 = vmatpush.bf16.msra.mxu0 0
  %480 = vmatpush.bf16.msra.mxu0 %v430
  %481 = vmatpush.bf16.msra.mxu0 %v429
  %482 = vmatpush.bf16.msra.mxu0 %v428
  %483 = vmatpush.bf16.msra.mxu0 %v427
  %484 = vmatmul.bf16.gmra.mxu0 %v471
  %v485 = vpop.f32.mrf.mxu0
  %v486 = vadd.f32 %v442, %v485
  %v487 = vpop.f32.mrf.mxu0
  %v488 = vadd.f32 %v447, %v487
  %489 = vmatmul.bf16.gmra.mxu0 %v474
  %v490 = vpop.f32.mrf.mxu0
  %v491 = vadd.f32 %v452, %v490
  %v492 = vpop.f32.mrf.mxu0
  %v493 = vadd.f32 %v457, %v492
  %494 = vdwg.mxu0
  %v495 = vmax.f32 %v486, 0.0
  %v496 = vmax.f32 %v488, 0.0
  %v497 = vmax.f32 %v491, 0.0
  %v498 = vmax.f32 %v493, 0.0
  %v499 = vpack.c.bf16 %v496, %v495
  %v500 = vpack.c.bf16 %v498, %v497
  %v501 = vld [vmem:[%s7] sm:$0xf]
  %v502 = vld [vmem:[%s7 + $0x4] sm:$0xf]
  %v503 = vld [vmem:[%s7 + $0x8] sm:$0xf]
  %v504 = vld [vmem:[%s7 + $0xc] sm:$0x3]
  %v505 = vld [vmem:[%s8] sm:$0xff]
  %v506 = vld [vmem:[%s8 + $0x8] sm:$0xff]
  %v507 = vld [vmem:[%s8 + $0x10] sm:$0xff]
  %v508 = vld [vmem:[%s8 + $0x18] sm:$0xf]
  %510 = vset.pattern.permute.xlu0 0
  %511 = vperm.xlu0 %510, %v505
  %v512 = vpop.permute.xlu0 %511
  %515 = vset.pattern.permute.xlu0 0
  %516 = vperm.xlu0 %515, %v506
  %v517 = vpop.permute.xlu0 %516
  %520 = vset.pattern.permute.xlu0 0
  %521 = vperm.xlu0 %520, %v507
  %v522 = vpop.permute.xlu0 %521
  %525 = vset.pattern.permute.xlu0 0
  %526 = vperm.xlu0 %525, %v508
  %v527 = vpop.permute.xlu0 %526
  %v533 = vunpack.c.l.b16 %v501
  %v534 = vunpack.c.l.b16 %v502
  %v535 = vunpack.c.l.b16 %v503
  %v536 = vunpack.c.l.b16 %v504
  %v537 = vpack.c.b16 %v534, %v533
  %v538 = vpack.c.b16 %v536, %v535
  %vm539 = vcmask 261120
  %v541 = vsel %vm539, %v537, 0
  %v544 = vsel %vm539, %v538, 0
  %546 = vmatpush.bf16.msra.mxu0 0
  %547 = vmatpush.bf16.msra.mxu0 0
  %548 = vmatpush.bf16.msra.mxu0 0
  %549 = vmatpush.bf16.msra.mxu0 0
  %550 = vmatpush.bf16.msra.mxu0 0
  %551 = vmatpush.bf16.msra.mxu0 0
  %552 = vmatpush.bf16.msra.mxu0 %v500
  %553 = vmatpush.bf16.msra.mxu0 %v499
  %554 = vmatmul.bf16.gmra.mxu0 %v541
  %v555 = vpop.f32.mrf.mxu0
  %v556 = vadd.f32 %v512, %v555
  %v557 = vpop.f32.mrf.mxu0
  %v558 = vadd.f32 %v517, %v557
  %559 = vmatmul.bf16.gmra.mxu0 %v544
  %v560 = vpop.f32.mrf.mxu0
  %v561 = vadd.f32 %v522, %v560
  %v562 = vpop.f32.mrf.mxu0
  %v563 = vadd.f32 %v527, %v562
  %564 = vdwg.mxu0
  %565 = vst [vmem:[%s9] sm:$0xff] %v556
  %566 = vst [vmem:[%s9 + $0x8] sm:$0xff] %v558
  %567 = vst [vmem:[%s9 + $0x10] sm:$0xff] %v561
  %568 = vst [vmem:[%s9 + $0x18] sm:$0xf] %v563
  // Predicated region
  $region38: #{keypoint_mlp_forward.1} parent=0 // pred_check
    _
  $region39: #{keypoint_mlp_forward.1} parent=0 // pred_check_branch
    %570 = sbr.rel (0) target = $region41
  $region40: #{keypoint_mlp_forward.1} parent=0 // pred_region
    _
  $region41: #{keypoint_mlp_forward.1} parent=0 // pred_fallthru
    _
  // Predicated region
  $region42: #{keypoint_mlp_forward.1} parent=0 // pred_check
    _
  $region43: #{keypoint_mlp_forward.1} parent=0 // pred_check_branch
    %572 = sbr.rel (0) target = $region45
  $region44: #{keypoint_mlp_forward.1} parent=0 // pred_region
    _
  $region45: #{keypoint_mlp_forward.1} parent=0 // pred_fallthru
    _

</llo_original>
